<compile_context>
chip_gen: v7x
topology: tpu7x:2x2x1
jax: 0.10.0
libtpu: 0.0.40
codegen_flags: <defaults>
</compile_context>

<pallas_src>
import functools

import jax
import jax.numpy as jnp
from jax import lax
from jax.experimental import pallas as pl
from jax.experimental.pallas import tpu as pltpu

LANE = 128


def _cdiv(a, b):
    return -(-a // b)


def _crit_f32(x):
    """SalsaNext label->criticality map, as float32.
       0 -> 4, 1..8 -> 1, 9..14 -> 2, 15..19 -> 3, anything else unchanged."""
    return jnp.where(x == 0, 4.0,
           jnp.where(x <= 8, 1.0,
           jnp.where(x <= 14, 2.0,
           jnp.where(x <= 19, 3.0, x.astype(jnp.float32)))))


# Criticality groups in class-index order (lo, hi_exclusive, criticality).
# Visiting them in this order with strict '>' preserves argmax's
# first-max tie-breaking.
_CRIT_GROUPS = ((0, 1, 4.0), (1, 9, 1.0), (9, 15, 2.0), (15, 20, 3.0))


def _class_diff_kernel(probas_ref, labels_ref, out_ref, *,
                       num_classes, tile_rows, chunk, n_full, rem,
                       tiles_per_slot, rows_valid, needs_mask, unroll,
                       absolute, normalize, activation):
    p = pl.program_id(1)
    t = pl.program_id(2)

    # Output block index depends only on (batch, parallel-slot) -> it stays
    # resident in VMEM across the pixel-tile axis and acts as the accumulator.
    @pl.when(t == 0)
    def _():
        out_ref[...] = jnp.zeros_like(out_ref)

    if needs_mask:
        # Hoisted once per grid step; only the fallback tiling (TR does not
        # divide R) ever needs the row mask.
        row_iota = lax.broadcasted_iota(jnp.int32, (chunk, LANE), 0)
        tile_row0 = (p * tiles_per_slot + t) * tile_rows

    def pred_crit(r0, rows):
        """Criticality of argmax_c probas on a (rows, LANE) slab (float32)."""
        slab = lambda c: probas_ref[0, c, pl.ds(r0, rows), :]
        if num_classes <= 20:
            # Running max per criticality group: one maximum per class, then
            # 3 ordered compares instead of a full argmax + crit select chain.
            best, crit = None, None
            for lo, hi, cval in _CRIT_GROUPS:
                if lo >= num_classes:
                    break
                g = slab(lo)
                for c in range(lo + 1, min(hi, num_classes)):
                    g = jnp.maximum(g, slab(c))
                if best is None:
                    best, crit = g, cval
                else:
                    take = g > best            # '>' keeps first-max ties
                    best = jnp.where(take, g, best)
                    crit = jnp.where(take, cval, crit)
            return crit
        # Generic fallback (num_classes > 20): full argmax, then crit map.
        best = slab(0)
        pred = jnp.zeros((rows, LANE), jnp.int32)
        for c in range(1, num_classes):
            cur = slab(c)
            take = cur > best
            best = jnp.where(take, cur, best)
            pred = jnp.where(take, jnp.int32(c), pred)
        return _crit_f32(pred)

    def diff_slab(r0, rows):
        lab = labels_ref[0, pl.ds(r0, rows), :]
        d = pred_crit(r0, rows) - _crit_f32(lab)
        if activation == "relu":
            d = jnp.maximum(d, 0.0)
        if absolute:
            d = jnp.abs(d)
        if normalize:
            d = d * 0.5
        if needs_mask:
            ri = row_iota if rows == chunk else row_iota[:rows]
            d = jnp.where(tile_row0 + r0 + ri < rows_valid, d, 0.0)
        return d

    def chunk_body(j, acc):
        r0 = pl.multiple_of(j * chunk, chunk)
        return acc + diff_slab(r0, chunk)

    acc = lax.fori_loop(0, n_full, chunk_body,
                        jnp.zeros((chunk, LANE), jnp.float32), unroll=unroll)
    out_ref[0, 0] += acc
    if rem:
        # Static remainder chunk (only when the whole image fits one tile and
        # its row count is not a multiple of the chunk size).
        out_ref[0, 0, pl.ds(0, rem), :] += diff_slab(n_full * chunk, rem)


def _vmem_budget():
    """(per-input-buffer byte budget, vmem_limit_bytes), generation-aware."""
    cap = None
    try:
        cap = getattr(pltpu.get_tpu_info(), "vmem_capacity_bytes", None)
    except Exception:
        cap = None
    if cap is None:
        cap = 64 * 1024 * 1024                     # conservative (v7x per-TC)
    if cap >= 100 * 1024 * 1024:                   # v5e / v6e: 128 MiB VMEM
        return 14 * 1024 * 1024, 64 * 1024 * 1024
    return 6 * 1024 * 1024, 40 * 1024 * 1024       # v7x: 64 MiB per TC


def _pick_tile_rows(R, chunk, budget_rows):
    """Pick TR: prefer a chunk-aligned TR that divides R exactly so no grid
    block overhangs the pixel axis.  Returns (TR, nT, needs_mask)."""
    if R <= budget_rows:
        return R, 1, False
    n0 = _cdiv(R, budget_rows)
    for n in range(n0, min(n0 + 64, R) + 1):
        if R % n == 0 and (R // n) % chunk == 0:
            return R // n, n, False
    # Fallback: balanced, chunk-aligned tiles; the last grid block overhangs R
    # and its rows are masked in-kernel.
    tr = _cdiv(_cdiv(R, n0), chunk) * chunk
    n = _cdiv(R, tr)
    return tr, n, (n * tr > R)


def class_difference_loss(probas, labels, *, absolute=True, normalize=True,
                          activation=None, max_tile_rows=None):
    """probas: [B, C, H, W] float, labels: [B, H, W] int -> scalar float32.

    Matches SalsaNext ClassDifferenceLoss with its defaults
    (label_type='class', per_image=False, ignore=None).
    """
    # TODO(synk): per_image=True / ignore / classes-subset /
    # label_type='criticality' variants of the torch module are not implemented.
    B, C, H, W = probas.shape
    HW = H * W
    R = _cdiv(HW, LANE)
    HWp = R * LANE

    # Layout-preserving (free) reshapes; NCHW is channel-major per image.
    p = probas.reshape(B, C, HW)
    l = labels.astype(jnp.int32).reshape(B, HW)
    if HWp != HW:
        # TODO(synk): rare slow path (H*W % 128 != 0) still materializes one
        # zero-padded copy in HBM; the padded pixels contribute exactly 0 to
        # the loss (all-zero probas -> crit 4 == crit of label 0), so no
        # in-kernel masking is needed for them.
        p = jnp.pad(p, ((0, 0), (0, 0), (0, HWp - HW)))
        l = jnp.pad(l, ((0, 0), (0, HWp - HW)))
    p = p.reshape(B, C, R, LANE)
    l = l.reshape(B, R, LANE)

    itemsize = jnp.dtype(p.dtype).itemsize
    chunk_target = 8 * max(1, 4 // itemsize)        # full-vreg slabs per step

    per_buf, vmem_limit = _vmem_budget()
    row_bytes = C * LANE * itemsize
    budget_rows = max(chunk_target, per_buf // row_bytes)
    if max_tile_rows is not None:
        budget_rows = max(1, min(budget_rows, max_tile_rows))

    TR, nT, needs_mask = _pick_tile_rows(R, chunk_target, budget_rows)
    chunk = min(chunk_target, TR)
    n_full = TR // chunk
    rem = TR - n_full * chunk
    unroll = max(1, min(4 if C <= 8 else 2, n_full))

    # Extra 'parallel' grid axis over pixel tiles keeps both v7x TensorCores
    # busy when the batch alone cannot be split across them.
    P = 2 if (B == 1 and nT >= 2 and nT % 2 == 0) else 1
    nTp = nT // P

    block_bytes = TR * row_bytes + TR * LANE * 4
    vmem_limit = max(vmem_limit, 2 * block_bytes + (8 << 20))

    kernel = functools.partial(
        _class_diff_kernel,
        num_classes=C, tile_rows=TR, chunk=chunk, n_full=n_full, rem=rem,
        tiles_per_slot=nTp, rows_valid=R, needs_mask=needs_mask,
        unroll=unroll, absolute=absolute, normalize=normalize,
        activation=activation)

    partial_sums = pl.pallas_call(
        kernel,
        out_shape=jax.ShapeDtypeStruct((B, P, chunk, LANE), jnp.float32),
        grid_spec=pltpu.PrefetchScalarGridSpec(
            num_scalar_prefetch=0,
            grid=(B, P, nTp),
            in_specs=[
                pl.BlockSpec((1, C, TR, LANE),
                             lambda b, pp, t: (b, 0, pp * nTp + t, 0)),
                pl.BlockSpec((1, TR, LANE),
                             lambda b, pp, t: (b, pp * nTp + t, 0)),
            ],
            out_specs=pl.BlockSpec((1, 1, chunk, LANE),
                                   lambda b, pp, t: (b, pp, 0, 0)),
        ),
        compiler_params=pltpu.CompilerParams(
            dimension_semantics=("parallel", "parallel", "arbitrary"),
            vmem_limit_bytes=vmem_limit),
    )(p, l)

    # Tiny lane-dense partial sums -> one final reduction + mean outside.
    return jnp.sum(partial_sums) / (B * HW)


def _reference_loss(probas, labels, *, absolute=True, normalize=True,
                    activation=None):
    pred = jnp.argmax(probas, axis=1)
    d = _crit_f32(pred) - _crit_f32(labels.astype(jnp.int32))
    if activation == "relu":
        d = jnp.maximum(d, 0.0)
    if absolute:
        d = jnp.abs(d)
    if normalize:
        d = d * 0.5
    return jnp.mean(d)


if __name__ == "__main__":
    key = jax.random.PRNGKey(0)
    cases = [
        # (B, C, H,  W,   max_tile_rows) -- all small, deterministic shapes
        (2, 4, 16, 16, None),   # single tile, TR = R = 2
        (2, 5, 40, 64, None),   # R = 20: chunk loop + static remainder chunk
        (1, 20, 32, 128, 8),    # all 4 criticality groups, multi-tile, P = 2
        (2, 6, 40, 64, 8),      # TR does not divide R -> masked fallback tile
        (1, 4, 10, 20, None),   # H*W % 128 != 0 -> zero-padded tail
    ]
    for idx, (B, C, H, W, mtr) in enumerate(cases):
        k1, k2, key = jax.random.split(key, 3)
        probas = jax.random.normal(k1, (B, C, H, W), dtype=jnp.float32)
        labels = jax.random.randint(k2, (B, H, W), 0, C, dtype=jnp.int32)
        loss = class_difference_loss(probas, labels, max_tile_rows=mtr)
        jax.block_until_ready(loss)
        ref = _reference_loss(probas, labels)
        assert jnp.allclose(loss, ref, atol=1e-6), (idx, float(loss), float(ref))
    print("KERNEL_OK")
</pallas_src>

<mosaic_0001>
module attributes {stable_mosaic.version = 11 : i64} {
  func.func @_class_diff_kernel(%arg0: i32, %arg1: i32, %arg2: i32, %arg3: memref<1x4x2x128xf32, #tpu.memory_space<vmem>>, %arg4: memref<1x2x128xi32, #tpu.memory_space<vmem>>, %arg5: memref<1x1x2x128xf32, #tpu.memory_space<vmem>>) attributes {dimension_semantics = [#tpu.dimension_semantics<parallel>, #tpu.dimension_semantics<parallel>, #tpu.dimension_semantics<arbitrary>], iteration_bounds = array<i64: 2, 1, 1>, scalar_prefetch = 0 : i64, scratch_operands = 0 : i64, tpu.core_type = #tpu.core_type<tc>, window_params = [{transform_indices = @transform_0, window_bounds = array<i64: 1, 4, 2, 128>}, {transform_indices = @transform_1, window_bounds = array<i64: 1, 2, 128>}, {transform_indices = @transform_2, window_bounds = array<i64: 1, 1, 2, 128>}]} {
    %c0_i32 = arith.constant 0 : i32
    %0 = arith.cmpi eq, %arg2, %c0_i32 : i32
    %1 = arith.extui %0 : i1 to i32
    %c0_i32_0 = arith.constant 0 : i32
    %2 = arith.cmpi ne, %1, %c0_i32_0 : i32
    scf.if %2 {
      %cst_28 = arith.constant 0.000000e+00 : f32
      %55 = vector.broadcast %cst_28 : f32 to vector<1x1x2x128xf32>
      %c0_29 = arith.constant 0 : index
      %c0_30 = arith.constant 0 : index
      %c0_31 = arith.constant 0 : index
      %c0_32 = arith.constant 0 : index
      %56 = vector.load %arg5[%c0_29, %c0_30, %c0_31, %c0_32] : memref<1x1x2x128xf32, #tpu.memory_space<vmem>>, vector<1x1x2x128xf32>
      tpu.vector_store %arg5[%c0_29, %c0_30, %c0_31, %c0_32], %55 {strides = array<i32>} : memref<1x1x2x128xf32, #tpu.memory_space<vmem>>, vector<1x1x2x128xf32>,
    } else {
    }
    %cst = arith.constant 0.000000e+00 : f32
    %3 = vector.broadcast %cst : f32 to vector<2x128xf32>
    %c0_i32_1 = arith.constant 0 : i32
    %c2_i32 = arith.constant 2 : i32
    %4 = arith.muli %c0_i32_1, %c2_i32 : i32
    %5 = tpu.assume_multiple %4, 2 : i32
    %c0 = arith.constant 0 : index
    %6 = arith.index_cast %5 : i32 to index
    %c0_2 = arith.constant 0 : index
    %7 = vector.load %arg4[%c0, %6, %c0_2] : memref<1x2x128xi32, #tpu.memory_space<vmem>>, vector<1x2x128xi32>
    %8 = vector.shape_cast %7 : vector<1x2x128xi32> to vector<2x128xi32>
    %c0_3 = arith.constant 0 : index
    %c0_4 = arith.constant 0 : index
    %9 = arith.index_cast %5 : i32 to index
    %c0_5 = arith.constant 0 : index
    %10 = vector.load %arg3[%c0_3, %c0_4, %9, %c0_5] : memref<1x4x2x128xf32, #tpu.memory_space<vmem>>, vector<1x1x2x128xf32>
    %11 = vector.shape_cast %10 : vector<1x1x2x128xf32> to vector<2x128xf32>
    %c0_6 = arith.constant 0 : index
    %c1 = arith.constant 1 : index
    %12 = arith.index_cast %5 : i32 to index
    %c0_7 = arith.constant 0 : index
    %13 = vector.load %arg3[%c0_6, %c1, %12, %c0_7] : memref<1x4x2x128xf32, #tpu.memory_space<vmem>>, vector<1x1x2x128xf32>
    %14 = vector.shape_cast %13 : vector<1x1x2x128xf32> to vector<2x128xf32>
    %c0_8 = arith.constant 0 : index
    %c2 = arith.constant 2 : index
    %15 = arith.index_cast %5 : i32 to index
    %c0_9 = arith.constant 0 : index
    %16 = vector.load %arg3[%c0_8, %c2, %15, %c0_9] : memref<1x4x2x128xf32, #tpu.memory_space<vmem>>, vector<1x1x2x128xf32>
    %17 = vector.shape_cast %16 : vector<1x1x2x128xf32> to vector<2x128xf32>
    %18 = arith.maximumf %14, %17 : vector<2x128xf32>
    %c0_10 = arith.constant 0 : index
    %c3 = arith.constant 3 : index
    %19 = arith.index_cast %5 : i32 to index
    %c0_11 = arith.constant 0 : index
    %20 = vector.load %arg3[%c0_10, %c3, %19, %c0_11] : memref<1x4x2x128xf32, #tpu.memory_space<vmem>>, vector<1x1x2x128xf32>
    %21 = vector.shape_cast %20 : vector<1x1x2x128xf32> to vector<2x128xf32>
    %22 = arith.maximumf %18, %21 : vector<2x128xf32>
    %23 = arith.cmpf ogt, %22, %11 : vector<2x128xf32>
    %cst_12 = arith.constant 1.000000e+00 : f32
    %cst_13 = arith.constant 4.000000e+00 : f32
    %24 = vector.broadcast %cst_12 : f32 to vector<2x128xf32>
    %25 = vector.broadcast %cst_13 : f32 to vector<2x128xf32>
    %26 = arith.select %23, %24, %25 : vector<2x128xi1>, vector<2x128xf32>
    %c0_i32_14 = arith.constant 0 : i32
    %27 = vector.broadcast %c0_i32_14 : i32 to vector<2x128xi32>
    %28 = arith.cmpi eq, %8, %27 : vector<2x128xi32>
    %c8_i32 = arith.constant 8 : i32
    %29 = vector.broadcast %c8_i32 : i32 to vector<2x128xi32>
    %30 = arith.cmpi sle, %8, %29 : vector<2x128xi32>
    %c14_i32 = arith.constant 14 : i32
    %31 = vector.broadcast %c14_i32 : i32 to vector<2x128xi32>
    %32 = arith.cmpi sle, %8, %31 : vector<2x128xi32>
    %c19_i32 = arith.constant 19 : i32
    %33 = vector.broadcast %c19_i32 : i32 to vector<2x128xi32>
    %34 = arith.cmpi sle, %8, %33 : vector<2x128xi32>
    %35 = arith.sitofp %8 : vector<2x128xi32> to vector<2x128xf32>
    %cst_15 = arith.constant 3.000000e+00 : f32
    %36 = vector.broadcast %cst_15 : f32 to vector<2x128xf32>
    %37 = arith.select %34, %36, %35 : vector<2x128xi1>, vector<2x128xf32>
    %cst_16 = arith.constant 2.000000e+00 : f32
    %38 = vector.broadcast %cst_16 : f32 to vector<2x128xf32>
    %39 = arith.select %32, %38, %37 : vector<2x128xi1>, vector<2x128xf32>
    %cst_17 = arith.constant 1.000000e+00 : f32
    %40 = vector.broadcast %cst_17 : f32 to vector<2x128xf32>
    %41 = arith.select %30, %40, %39 : vector<2x128xi1>, vector<2x128xf32>
    %cst_18 = arith.constant 4.000000e+00 : f32
    %42 = vector.broadcast %cst_18 : f32 to vector<2x128xf32>
    %43 = arith.select %28, %42, %41 : vector<2x128xi1>, vector<2x128xf32>
    %44 = arith.subf %26, %43 : vector<2x128xf32>
    %45 = math.absf %44 : vector<2x128xf32>
    %cst_19 = arith.constant 5.000000e-01 : f32
    %46 = vector.broadcast %cst_19 : f32 to vector<2x128xf32>
    %47 = arith.mulf %45, %46 : vector<2x128xf32>
    %48 = arith.addf %3, %47 : vector<2x128xf32>
    %c1_i32 = arith.constant 1 : i32
    %c0_20 = arith.constant 0 : index
    %c0_21 = arith.constant 0 : index
    %c0_22 = arith.constant 0 : index
    %c0_23 = arith.constant 0 : index
    %49 = vector.load %arg5[%c0_20, %c0_21, %c0_22, %c0_23] : memref<1x1x2x128xf32, #tpu.memory_space<vmem>>, vector<1x1x2x128xf32>
    %50 = vector.shape_cast %49 : vector<1x1x2x128xf32> to vector<2x128xf32>
    %51 = arith.addf %50, %48 : vector<2x128xf32>
    %c0_24 = arith.constant 0 : index
    %c0_25 = arith.constant 0 : index
    %c0_26 = arith.constant 0 : index
    %c0_27 = arith.constant 0 : index
    %52 = vector.load %arg5[%c0_24, %c0_25, %c0_26, %c0_27] : memref<1x1x2x128xf32, #tpu.memory_space<vmem>>, vector<1x1x2x128xf32>
    %53 = vector.shape_cast %52 : vector<1x1x2x128xf32> to vector<2x128xf32>
    %54 = vector.shape_cast %51 : vector<2x128xf32> to vector<1x1x2x128xf32>
    tpu.vector_store %arg5[%c0_24, %c0_25, %c0_26, %c0_27], %54 {strides = array<i32>} : memref<1x1x2x128xf32, #tpu.memory_space<vmem>>, vector<1x1x2x128xf32>,
    return
  }
  func.func @transform_0(%arg0: i32, %arg1: i32, %arg2: i32) -> (i32, i32, i32, i32) {
    %c1_i32 = arith.constant 1 : i32
    %0 = arith.muli %arg1, %c1_i32 : i32
    %1 = arith.addi %0, %arg2 : i32
    %c0_i32 = arith.constant 0 : i32
    %c0_i32_0 = arith.constant 0 : i32
    %c0_i32_1 = arith.constant 0 : i32
    return %arg0, %c0_i32, %1, %c0_i32_0 : i32, i32, i32, i32
  }
  func.func @transform_1(%arg0: i32, %arg1: i32, %arg2: i32) -> (i32, i32, i32) {
    %c1_i32 = arith.constant 1 : i32
    %0 = arith.muli %arg1, %c1_i32 : i32
    %1 = arith.addi %0, %arg2 : i32
    %c0_i32 = arith.constant 0 : i32
    %c0_i32_0 = arith.constant 0 : i32
    return %arg0, %1, %c0_i32 : i32, i32, i32
  }
  func.func @transform_2(%arg0: i32, %arg1: i32, %arg2: i32) -> (i32, i32, i32, i32) {
    %c0_i32 = arith.constant 0 : i32
    %c0_i32_0 = arith.constant 0 : i32
    %c0_i32_1 = arith.constant 0 : i32
    return %arg0, %arg1, %c0_i32, %c0_i32_0 : i32, i32, i32, i32
  }
}

</mosaic_0001>

<llo_original>
// kernel: tpu_custom_call.1
$region0: #{tpu_custom_call.1}
  #allocation0 [shape = 'u32[]', space=smem, size = 0x4, offset = 0x4, fixed_abs, tag = 'smem constant byte address 0x4 - core index']
  #allocation1 [shape = 'u32[144,128]{1,0:T(1,128)}', space=vmem, size = 0x12000, scoped, tag = 'internal scratch']
  %s0 = inlined_call_operand.hbm [shape: f32[2,4,2,128], index: 0, kind: input, shape index: {}]
  %s1 = inlined_call_operand.hbm [shape: s32[2,2,128], index: 1, kind: input, shape index: {}]
  %s2 = inlined_call_operand.hbm [shape: f32[2,1,2,128], index: 2, kind: output, shape index: {}]
  %s3 = sld [smem:[#allocation0]]
  $region53: #{tpu_custom_call.1} parent=0
    _
  %s5 = ssub.s32 1, %s3
  %s6 = scalar_select 0, %s5, %s3
  $region1: #{tpu_custom_call.1} parent=0
    #allocation2 [shape = 'u8[8192]{0}', space=vmem, size = 0x2000, scoped, tag = 'input window, operand 0']
    #allocation3 [shape = 's32[2]{0}', space=sflag, size = 0x8, scoped, tag = 'scoped memory for tpu_custom_call.1']
    #allocation4 [shape = 's32[2]{0}', space=sflag, size = 0x8, scoped, tag = 'scoped memory for tpu_custom_call.1']
    #allocation5 [shape = 'u8[2048]{0}', space=vmem, size = 0x800, scoped, tag = 'input window, operand 1']
    #allocation6 [shape = 's32[2]{0}', space=sflag, size = 0x8, scoped, tag = 'scoped memory for tpu_custom_call.1']
    #allocation7 [shape = 'u8[2048]{0}', space=vmem, size = 0x800, scoped, tag = 'output window, operand 0']
    %7 = vsyncpa [#allocation3], 0
    %s8 = scalar_lea.sflag [#allocation3], 1
    %9 = vsyncpa %s8, 0
    %10 = vsyncpa [#allocation6], 0
    %s11 = scalar_lea.sflag [#allocation6], 1
    %12 = vsyncpa %s11, 0
    %13 = vsyncpa [#allocation4], 0
    %s14 = scalar_lea.sflag [#allocation4], 1
    %15 = vsyncpa %s14, 0
    loop: start=0, step=1, limit=4
    $region2: #{tpu_custom_call.1} parent=1 // loop_pre_header
      _
    $region3: #{tpu_custom_call.1} parent=1 // loop_header
      %s17 = sphi 0, %s21
      %p18 = scmp.ge.s32.totalorder %s17, 4
      %s24 = sphi 0, %s43
      %s25 = sphi 0, %s39
      %s26 = sphi 0, %s35
      %s27 = sphi 0, %s24
      %s28 = sphi 0, %s25
      %s29 = sphi 0, %s26
      %s30 = sphi 0, %s27
      %s31 = sphi 0, %s28
      %s32 = sphi 0, %s29
      %s50 = sphi 0, %s52
      %s53 = sphi 0, %s50
      %s54 = sphi 0, %s53
      %s70 = sphi 0, %s54
      %s80 = sphi 0, %s82
      %s83 = sphi 0, %s80
      %s84 = sphi 0, %s83
      %s100 = sphi 0, %s84
      %s108 = sphi 0, %s110
      %s111 = sphi 0, %s108
      %s112 = sphi 0, %s111
      %s128 = sphi 0, %s112
    $region4: #{tpu_custom_call.1} parent=1 // loop_header_branch
      %20 = sbr.rel (%p18) target = $region8
    $region5: #{tpu_custom_call.1} parent=1 // loop_body
      %s22 = ssub.s32 %s17, 1
      %s23 = ssub.s32 %s17, 2
      %s33 = sadd.s32 1, %s26
      %p34 = scmp.ge.s32.totalorder %s33, 1
      %s35 = scalar_select %p34, 0, %s33
      %s36 = sadd.s32 1, %s25
      %s37 = scalar_select %p34, %s36, %s25
      %p38 = scmp.ge.s32.totalorder %s37, 1
      %s39 = scalar_select %p38, 0, %s37
      %s40 = sadd.s32 1, %s24
      %s41 = scalar_select %p38, %s40, %s24
      %p42 = scmp.ge.s32.totalorder %s41, 2
      %s43 = scalar_select %p42, 0, %s41
      %s44 = sadd.s32 %s25, %s26
      %s45 = sadd.s32 %s39, %s35
      %s46 = ssub.s32 %s24, %s43
      %s47 = ssub.s32 %s44, %s45
      %s48 = sor.u32 %s46, %s47
      %p49 = scmp.eq.s32.totalorder %s48, 0
      %s51 = sadd.s32 %s50, 1
      %s52 = scalar_select %p49, %s50, %s51
      %p55 = pneg %p49
      %p56 = scmp.eq.s32.totalorder %s17, 1
      %p57 = por %p55, %p56
      %p58 = scmp.ne.s32.totalorder %s50, %s53
      %p59 = scmp.eq.s32.totalorder %s17, 0
      %p60 = por %p58, %p59
      %p61 = scmp.ne.s32.totalorder %s50, %s53
      %p62 = scmp.eq.s32.totalorder %s22, 1
      %p63 = por %p61, %p62
      %p64 = scmp.ne.s32.totalorder %s53, %s54
      %p65 = scmp.eq.s32.totalorder %s22, 0
      %p66 = por %p64, %p65
      %p67 = scmp.ne.s32.totalorder %s53, %s54
      %p68 = scmp.eq.s32.totalorder %s23, 1
      %p69 = por %p67, %p68
      %p71 = scmp.ne.s32.totalorder %s54, %s70
      %p72 = scmp.eq.s32.totalorder %s23, 0
      %p73 = por %p71, %p72
      %s74 = sadd.s32 %s25, %s26
      %s75 = sadd.s32 %s39, %s35
      %s76 = ssub.s32 %s24, %s43
      %s77 = ssub.s32 %s74, %s75
      %s78 = sor.u32 %s76, %s77
      %p79 = scmp.eq.s32.totalorder %s78, 0
      %s81 = sadd.s32 %s80, 1
      %s82 = scalar_select %p79, %s80, %s81
      %p85 = pneg %p79
      %p86 = scmp.eq.s32.totalorder %s17, 1
      %p87 = por %p85, %p86
      %p88 = scmp.ne.s32.totalorder %s80, %s83
      %p89 = scmp.eq.s32.totalorder %s17, 0
      %p90 = por %p88, %p89
      %p91 = scmp.ne.s32.totalorder %s80, %s83
      %p92 = scmp.eq.s32.totalorder %s22, 1
      %p93 = por %p91, %p92
      %p94 = scmp.ne.s32.totalorder %s83, %s84
      %p95 = scmp.eq.s32.totalorder %s22, 0
      %p96 = por %p94, %p95
      %p97 = scmp.ne.s32.totalorder %s83, %s84
      %p98 = scmp.eq.s32.totalorder %s23, 1
      %p99 = por %p97, %p98
      %p101 = scmp.ne.s32.totalorder %s84, %s100
      %p102 = scmp.eq.s32.totalorder %s23, 0
      %p103 = por %p101, %p102
      %s104 = ssub.s32 %s24, %s43
      %s105 = ssub.s32 %s25, %s39
      %s106 = sor.u32 %s104, %s105
      %p107 = scmp.eq.s32.totalorder %s106, 0
      %s109 = sadd.s32 %s108, 1
      %s110 = scalar_select %p107, %s108, %s109
      %p113 = pneg %p107
      %p114 = scmp.eq.s32.totalorder %s17, 1
      %p115 = por %p113, %p114
      %p116 = scmp.ne.s32.totalorder %s108, %s111
      %p117 = scmp.eq.s32.totalorder %s17, 0
      %p118 = por %p116, %p117
      %p119 = scmp.ne.s32.totalorder %s108, %s111
      %p120 = scmp.eq.s32.totalorder %s22, 1
      %p121 = por %p119, %p120
      %p122 = scmp.ne.s32.totalorder %s111, %s112
      %p123 = scmp.eq.s32.totalorder %s22, 0
      %p124 = por %p122, %p123
      %p125 = scmp.ne.s32.totalorder %s111, %s112
      %p126 = scmp.eq.s32.totalorder %s23, 1
      %p127 = por %p125, %p126
      %p129 = scmp.ne.s32.totalorder %s112, %s128
      %p130 = scmp.eq.s32.totalorder %s23, 0
      %p131 = por %p129, %p130
      %p132 = scmp.le.s32.totalorder 1, %s17
      %p133 = scmp.lt.s32.totalorder %s17, 3
      %p134 = pnand %p132, %p133
      %p135 = pneg %p134
      // Predicated region
      $region9: #{tpu_custom_call.1} parent=5 // pred_check
        _
      $region10: #{tpu_custom_call.1} parent=5 // pred_check_branch
        %137 = sbr.rel (%p134) target = $region12
      $region11: #{tpu_custom_call.1} parent=5 // pred_region
        %s138 = ssub.s32 %s17, 1
      $region12: #{tpu_custom_call.1} parent=5 // pred_fallthru
        _
      %p139 = scmp.lt.s32.totalorder %s17, 2
      // Predicated region
      $region13: #{tpu_custom_call.1} parent=5 // pred_check
        %p140 = pneg %p139
      $region14: #{tpu_custom_call.1} parent=5 // pred_check_branch
        %142 = sbr.rel (%p140) target = $region16
      $region15: #{tpu_custom_call.1} parent=5 // pred_region
        // Predicated region
        $region17: #{tpu_custom_call.1} parent=15 // pred_check
          %p143 = pneg %p60
        $region18: #{tpu_custom_call.1} parent=15 // pred_check_branch
          %145 = sbr.rel (%p143) target = $region20
        $region19: #{tpu_custom_call.1} parent=15 // pred_region
          %s146 = sand.u32 %s50, 1
          %s147 = scalar_lea.sflag [#allocation3], %s146
          %s148 = sand.u32 %s50, 1
          %s149 = smul.addr %s148, 8
          %s150 = scalar_lea.vmem [#allocation2], %s149
          %s151 = sadd.s32 %s25, %s26
          %s153 = ssub.s32 128, 128
          %154 = vsyncadd %s147, %s153
          %s155 = smul.addr %s24, 4
          %s156 = sadd.s32 %s151, %s155
          %s157 = smul.addr %s156, 32
          %s158 = scalar_lea.hbm %s0, %s157
          %s159 = sshll.u32 %s150, 4
          %s160 = int_to_ptr.vmem [resolvable:$true] %s159
          %165 = dma.hbm_to_vmem [thread:$0]  %s158, 128, %s160, %s147, 32, 32, 2
        $region20: #{tpu_custom_call.1} parent=15 // pred_fallthru
          _
        // Predicated region
        $region21: #{tpu_custom_call.1} parent=15 // pred_check
          %p166 = pneg %p90
        $region22: #{tpu_custom_call.1} parent=15 // pred_check_branch
          %168 = sbr.rel (%p166) target = $region24
        $region23: #{tpu_custom_call.1} parent=15 // pred_region
          %s169 = sand.u32 %s80, 1
          %s170 = scalar_lea.sflag [#allocation6], %s169
          %s171 = sand.u32 %s80, 1
          %s172 = smul.addr %s171, 2
          %s173 = scalar_lea.vmem [#allocation5], %s172
          %s174 = sadd.s32 %s25, %s26
          %s176 = ssub.s32 32, 32
          %177 = vsyncadd %s170, %s176
          %s178 = sadd.s32 %s174, %s24
          %s179 = smul.addr %s178, 32
          %s180 = scalar_lea.hbm %s1, %s179
          %s182 = sshll.u32 %s173, 4
          %s183 = int_to_ptr.vmem [resolvable:$true] %s182
          %185 = dma.hbm_to_vmem [thread:$0]  %s180, 32, %s183, %s170
        $region24: #{tpu_custom_call.1} parent=15 // pred_fallthru
          _
      $region16: #{tpu_custom_call.1} parent=5 // pred_fallthru
        _
      %p186 = scmp.le.s32.totalorder 1, %s17
      %p187 = scmp.lt.s32.totalorder %s17, 3
      %p188 = pnand %p186, %p187
      %p189 = pneg %p188
      // Predicated region
      $region25: #{tpu_custom_call.1} parent=5 // pred_check
        _
      $region26: #{tpu_custom_call.1} parent=5 // pred_check_branch
        %191 = sbr.rel (%p188) target = $region28
      $region27: #{tpu_custom_call.1} parent=5 // pred_region
        %s192 = ssub.s32 %s17, 1
        %s193 = sand.u32 %s53, 1
        %s194 = scalar_lea.sflag [#allocation3], %s193
        %s195 = sand.u32 %s53, 1
        %s196 = smul.addr %s195, 8
        %s197 = scalar_lea.vmem [#allocation2], %s196
        // Predicated region
        $region29: #{tpu_custom_call.1} parent=27 // pred_check
          %p198 = pneg %p66
        $region30: #{tpu_custom_call.1} parent=27 // pred_check_branch
          %200 = sbr.rel (%p198) target = $region32
        $region31: #{tpu_custom_call.1} parent=27 // pred_region
          %201 = dma.done %s194, 128
        $region32: #{tpu_custom_call.1} parent=27 // pred_fallthru
          _
        %s202 = sand.u32 %s83, 1
        %s203 = scalar_lea.sflag [#allocation6], %s202
        %s204 = sand.u32 %s83, 1
        %s205 = smul.addr %s204, 2
        %s206 = scalar_lea.vmem [#allocation5], %s205
        // Predicated region
        $region33: #{tpu_custom_call.1} parent=27 // pred_check
          %p207 = pneg %p96
        $region34: #{tpu_custom_call.1} parent=27 // pred_check_branch
          %209 = sbr.rel (%p207) target = $region36
        $region35: #{tpu_custom_call.1} parent=27 // pred_region
          %210 = dma.done %s203, 32
        $region36: #{tpu_custom_call.1} parent=27 // pred_fallthru
          _
        %s211 = sand.u32 %s53, 1
        %s212 = scalar_lea.sflag [#allocation3], %s211
        %s213 = sand.u32 %s53, 1
        %s214 = smul.addr %s213, 8
        %s215 = scalar_lea.vmem [#allocation2], %s214
        %p216 = pneg %p66
        %p217 = pneg %p63
        %s218 = sand.u32 %s83, 1
        %s219 = scalar_lea.sflag [#allocation6], %s218
        %s220 = sand.u32 %s83, 1
        %s221 = smul.addr %s220, 2
        %s222 = scalar_lea.vmem [#allocation5], %s221
        %p223 = pneg %p96
        %p224 = pneg %p93
        %p225 = pneg %p124
        %p226 = pneg %p121
        %s227 = sand.u32 %s111, 1
        %s228 = scalar_lea.sflag [#allocation4], %s227
        %s229 = sand.u32 %s111, 1
        %s230 = smul.addr %s229, 2
        %s231 = scalar_lea.vmem [#allocation7], %s230
        %s232 = sadd.s32 %s28, %s29
        %s233 = sadd.s32 %s28, %s29
        %p234 = scmp.eq.s32.totalorder %s29, 0
        // Predicated region
        $region37: #{tpu_custom_call.1} parent=27 // pred_check
          %p235 = pneg %p234
        $region38: #{tpu_custom_call.1} parent=27 // pred_check_branch
          %237 = sbr.rel (%p235) target = $region40
        $region39: #{tpu_custom_call.1} parent=27 // pred_region
          %238 = vst [vmem:[%s231] sm:$0x3] 0.0
        $region40: #{tpu_custom_call.1} parent=27 // pred_fallthru
          _
        %v239 = vld [vmem:[%s206] sm:$0x3]
        %v240 = vld [vmem:[%s197] sm:$0x3]
        %s241 = sadd.s32 0, 2
        %s242 = scalar_lea.vmem %s197, %s241 [#allocation2]
        %v243 = vld [vmem:[%s242] sm:$0x3]
        %s244 = sadd.s32 0, 4
        %s245 = scalar_lea.vmem %s197, %s244 [#allocation2]
        %v246 = vld [vmem:[%s245] sm:$0x3]
        %v247 = vmax.f32 %v243, %v246
        %s248 = sadd.s32 0, 6
        %s249 = scalar_lea.vmem %s197, %s248 [#allocation2]
        %v250 = vld [vmem:[%s249] sm:$0x3]
        %v251 = vmax.f32 %v247, %v250
        %vm252 = vcmp.gt.f32.partialorder %v251, %v240
        %v253 = vsel %vm252, 1.0, 4.0
        %vm254 = vcmp.eq.s32.totalorder %v239, 0
        %vm255 = vcmp.le.s32.totalorder %v239, 8
        %vm256 = vcmp.le.s32.totalorder %v239, 14
        %vm257 = vcmp.le.s32.totalorder %v239, 19
        %v258 = vcvt.s32.f32 %v239
        %v259 = vsel %vm257, 3.0, %v258
        %v260 = vsel %vm256, 2.0, %v259
        %v261 = vsel %vm255, 1.0, %v260
        %v262 = vsel %vm254, 4.0, %v261
        %v263 = vsub.f32 %v253, %v262
        %v264 = vand.u32 2147483647, %v263
        %v265 = vmul.f32 %v264, 0.5
        %v266 = vadd.f32 %v265, 0.0
        %v267 = vld [vmem:[%s231] sm:$0x3]
        %v268 = vadd.f32 %v267, %v266
        %269 = vst [vmem:[%s231] sm:$0x3] %v268
        %s270 = sand.u32 %s111, 1
        %s271 = scalar_lea.sflag [#allocation4], %s270
        %s272 = sand.u32 %s111, 1
        %s273 = smul.addr %s272, 2
        %s274 = scalar_lea.vmem [#allocation7], %s273
        // Predicated region
        $region41: #{tpu_custom_call.1} parent=27 // pred_check
          %p275 = pneg %p121
        $region42: #{tpu_custom_call.1} parent=27 // pred_check_branch
          %277 = sbr.rel (%p275) target = $region44
        $region43: #{tpu_custom_call.1} parent=27 // pred_region
          %s279 = ssub.s32 32, 32
          %280 = vsyncadd %s271, %s279
          %s281 = sadd.s32 %s28, %s27
          %s282 = smul.addr %s281, 32
          %s283 = scalar_lea.hbm %s2, %s282
          %s285 = sshll.u32 %s274, 4
          %s286 = int_to_ptr.vmem [resolvable:$true] %s285
          %288 = dma.vmem_to_hbm [thread:$0]  %s286, 32, %s283, %s271
        $region44: #{tpu_custom_call.1} parent=27 // pred_fallthru
          _
      $region28: #{tpu_custom_call.1} parent=5 // pred_fallthru
        _
      %p289 = scmp.le.s32.totalorder 2, %s17
      // Predicated region
      $region45: #{tpu_custom_call.1} parent=5 // pred_check
        %p290 = pneg %p289
      $region46: #{tpu_custom_call.1} parent=5 // pred_check_branch
        %292 = sbr.rel (%p290) target = $region48
      $region47: #{tpu_custom_call.1} parent=5 // pred_region
        %s293 = ssub.s32 %s17, 2
        // Predicated region
        $region49: #{tpu_custom_call.1} parent=47 // pred_check
          %p294 = pneg %p127
        $region50: #{tpu_custom_call.1} parent=47 // pred_check_branch
          %296 = sbr.rel (%p294) target = $region52
        $region51: #{tpu_custom_call.1} parent=47 // pred_region
          %s297 = sand.u32 %s112, 1
          %s298 = scalar_lea.sflag [#allocation4], %s297
          %s299 = sand.u32 %s112, 1
          %s300 = smul.addr %s299, 2
          %s301 = scalar_lea.vmem [#allocation7], %s300
          %302 = dma.done %s298, 32
        $region52: #{tpu_custom_call.1} parent=47 // pred_fallthru
          _
      $region48: #{tpu_custom_call.1} parent=5 // pred_fallthru
        _
    $region6: #{tpu_custom_call.1} parent=1 // loop_footer
      %s21 = sadd.s32 1, %s17
    $region7: #{tpu_custom_call.1} parent=1 // loop_footer_branch
      %16 = sbr.rel target = $region3
    $region8: #{tpu_custom_call.1} parent=1 // loop_exit
      _
    %303 = vsyncpa [#allocation3], 1
    %s304 = scalar_lea.sflag [#allocation3], 1
    %305 = vsyncpa %s304, 1
    %306 = vsyncpa [#allocation6], 1
    %s307 = scalar_lea.sflag [#allocation6], 1
    %308 = vsyncpa %s307, 1
    %309 = vsyncpa [#allocation4], 1
    %s310 = scalar_lea.sflag [#allocation4], 1
    %311 = vsyncpa %s310, 1

</llo_original>
